<compile_context>
chip_gen: v7x
topology: tpu7x:2x2x1
jax: 0.10.0
libtpu: 0.0.40
codegen_flags: <defaults>
</compile_context>

<pallas_src>
import jax
import jax.numpy as jnp
from jax.experimental import pallas as pl
from jax.experimental.pallas import tpu as pltpu

# ---- configuration (mirrors LitModel.__init__ arguments) ----
NO_FEATURES = 8          # no_features
HIDDEN = 32              # configuration_dict['no_neurons_in_hidden_layers']
NO_HIDDEN_LAYERS = 2     # configuration_dict['no_hidden_layers']
ACTIVATION = "relu"      # activation ('relu' or 'tanh')
DROPOUT_P = 0.1          # configuration_dict['p'] (identity in eval/forward)

NUM_LAYERS = NO_HIDDEN_LAYERS + 2   # input layer + L hidden layers + final layer
F_PAD = NO_FEATURES                 # 8 -> already a legal f32 sublane tile
BATCH = 1024                        # rows per call (amortizes fixed launch overhead)
TILE_B = 512                        # batch tile on the lane axis -> grid of 2


def _act(h):
    if ACTIVATION == "relu":
        return jnp.maximum(h, 0.0)
    elif ACTIVATION == "tanh":
        return jnp.tanh(h)
    return h


def mlp_kernel(x_ref, w0_ref, w_ref, b_ref, o_ref):
    # x_ref  : (F_PAD, TILE_B)               transposed input tile (no feature padding)
    # w0_ref : (HIDDEN, F_PAD)               layer-0 W^T; VMEM-resident (constant index_map)
    # w_ref  : (NUM_LAYERS-1, HIDDEN, HIDDEN) layers 1..L+1 W^T, final layer zero-padded
    # b_ref  : (NUM_LAYERS, HIDDEN, 1)        per-layer bias column, final layer zero-padded
    # o_ref  : (F_PAD, TILE_B)               only the 8 valid output rows are stored
    # TODO(synk): training-mode dropout not implemented (would use pltpu.prng_seed +
    # pltpu.prng_random_bits with a scalar-prefetch seed); eval-mode identity used.
    h = jnp.dot(w0_ref[...], x_ref[...], preferred_element_type=jnp.float32) + b_ref[0]
    h = _act(h)
    for l in range(1, NUM_LAYERS):  # static python loop, unrolled at trace time
        h = jnp.dot(w_ref[l - 1], h, preferred_element_type=jnp.float32) + b_ref[l]
        if l < NUM_LAYERS - 1:       # no activation after the final linear layer
            h = _act(h)
    # final layer's padded rows F_PAD..HIDDEN-1 are exact zeros; store only the
    # first 8 rows (clean sublane-tile boundary, lane-dense unmasked store).
    o_ref[...] = h[:F_PAD].astype(o_ref.dtype)


def pack_params(params):
    """Pack nn.Linear-style params once (hoisted out of the forward path).

    Returns:
      w0t    : (HIDDEN, F_PAD)                layer-0 W^T (no padding needed)
      w_slab : (NUM_LAYERS-1, HIDDEN, HIDDEN) layers 1..L+1 W^T, final zero-padded
      b_slab : (NUM_LAYERS, HIDDEN, 1)        bias columns, final zero-padded
    """
    w0, b0, wh, bh, wf, bf = params
    w0t = jnp.asarray(w0.T, jnp.float32)                         # (H, F)

    w_slab = jnp.zeros((NUM_LAYERS - 1, HIDDEN, HIDDEN), jnp.float32)
    b_slab = jnp.zeros((NUM_LAYERS, HIDDEN, 1), jnp.float32)
    b_slab = b_slab.at[0, :HIDDEN, 0].set(b0)
    # hidden layers: H -> H
    for i in range(NO_HIDDEN_LAYERS):
        w_slab = w_slab.at[i, :HIDDEN, :HIDDEN].set(wh[i].T)
        b_slab = b_slab.at[1 + i, :HIDDEN, 0].set(bh[i])
    # final layer: H -> F  (padded output rows stay exactly zero)
    w_slab = w_slab.at[NUM_LAYERS - 2, :NO_FEATURES, :HIDDEN].set(wf.T)
    b_slab = b_slab.at[NUM_LAYERS - 1, :NO_FEATURES, 0].set(bf)
    return w0t, w_slab, b_slab


def lit_model_forward(x, packed_params, *, tile_b=TILE_B):
    """x: (B, NO_FEATURES) f32, packed_params from pack_params() -> (B, NO_FEATURES) f32."""
    w0t, w_slab, b_slab = packed_params
    batch, feat = x.shape
    b_pad = tile_b * pl.cdiv(batch, tile_b)

    # Layout plumbing: batch on the lane axis.  F = 8 rows are already a legal
    # f32 sublane tile, so only the batch dimension may need padding.
    if batch == b_pad:
        xt = x.T
    else:
        xt = jnp.zeros((feat, b_pad), jnp.float32).at[:, :batch].set(x.T)

    out_t = pl.pallas_call(
        mlp_kernel,
        out_shape=jax.ShapeDtypeStruct((F_PAD, b_pad), jnp.float32),
        grid_spec=pltpu.PrefetchScalarGridSpec(
            num_scalar_prefetch=0,
            grid=(b_pad // tile_b,),
            in_specs=[
                pl.BlockSpec((F_PAD, tile_b), lambda i: (0, i)),
                # constant block indices -> parameters DMA'd once, VMEM-resident
                pl.BlockSpec((HIDDEN, F_PAD), lambda i: (0, 0)),
                pl.BlockSpec((NUM_LAYERS - 1, HIDDEN, HIDDEN), lambda i: (0, 0, 0)),
                pl.BlockSpec((NUM_LAYERS, HIDDEN, 1), lambda i: (0, 0, 0)),
            ],
            out_specs=pl.BlockSpec((F_PAD, tile_b), lambda i: (0, i)),
        ),
        compiler_params=pltpu.CompilerParams(
            dimension_semantics=("parallel",)),
    )(xt, w0t, w_slab, b_slab)

    # Undo batch padding / transpose (no feature slice needed anymore).
    return out_t[:, :batch].T


def init_params(key):
    """Deterministic init matching nn.Linear default: U(-1/sqrt(fan_in), +1/sqrt(fan_in))."""
    ks = jax.random.split(key, 6)

    def lin(kw, kb, fan_in, fan_out):
        bound = 1.0 / jnp.sqrt(fan_in)
        w = jax.random.uniform(kw, (fan_in, fan_out), jnp.float32, -bound, bound)
        b = jax.random.uniform(kb, (fan_out,), jnp.float32, -bound, bound)
        return w, b

    w0, b0 = lin(ks[0], ks[1], NO_FEATURES, HIDDEN)
    wh_list, bh_list = [], []
    kh = jax.random.split(ks[2], 2 * NO_HIDDEN_LAYERS)
    for i in range(NO_HIDDEN_LAYERS):
        w, b = lin(kh[2 * i], kh[2 * i + 1], HIDDEN, HIDDEN)
        wh_list.append(w)
        bh_list.append(b)
    wh = jnp.stack(wh_list, axis=0)            # (L, H, H)
    bh = jnp.stack(bh_list, axis=0)            # (L, H)
    wf, bf = lin(ks[3], ks[4], HIDDEN, NO_FEATURES)
    return w0, b0, wh, bh, wf, bf


def reference_forward(x, params):
    """Plain-JAX reference for correctness check (eval-mode: dropout = identity)."""
    w0, b0, wh, bh, wf, bf = params
    h = _act(x @ w0 + b0)
    for i in range(NO_HIDDEN_LAYERS):
        h = _act(h @ wh[i] + bh[i])
    return h @ wf + bf


if __name__ == "__main__":
    key = jax.random.PRNGKey(0)
    kx, kp = jax.random.split(key)
    x = jax.random.normal(kx, (BATCH, NO_FEATURES), dtype=jnp.float32)
    params = init_params(kp)

    # pack once (outside the forward path), reuse for every forward call
    packed = pack_params(params)
    packed = jax.block_until_ready(packed)

    out = lit_model_forward(x, packed)
    out = jax.block_until_ready(out)

    ref = reference_forward(x, params)
    assert out.shape == (BATCH, NO_FEATURES)
    assert jnp.allclose(out, ref, atol=1e-4, rtol=1e-4), "mismatch vs reference"
    print("KERNEL_OK")
</pallas_src>

<mosaic_0001>
module attributes {stable_mosaic.version = 11 : i64} {
  func.func @mlp_kernel(%arg0: i32, %arg1: memref<8x512xf32, #tpu.memory_space<vmem>>, %arg2: memref<32x8xf32, #tpu.memory_space<vmem>>, %arg3: memref<3x32x32xf32, #tpu.memory_space<vmem>>, %arg4: memref<4x32x1xf32, #tpu.memory_space<vmem>>, %arg5: memref<8x512xf32, #tpu.memory_space<vmem>>) attributes {dimension_semantics = [#tpu.dimension_semantics<parallel>], iteration_bounds = array<i64: 2>, scalar_prefetch = 0 : i64, scratch_operands = 0 : i64, tpu.core_type = #tpu.core_type<tc>, window_params = [{transform_indices = @transform_0, window_bounds = array<i64: 8, 512>}, {pipeline_mode = #tpu.pipeline_mode<synchronous>, transform_indices = @transform_1, window_bounds = array<i64: 32, 8>}, {pipeline_mode = #tpu.pipeline_mode<synchronous>, transform_indices = @transform_2, window_bounds = array<i64: 3, 32, 32>}, {pipeline_mode = #tpu.pipeline_mode<synchronous>, transform_indices = @transform_3, window_bounds = array<i64: 4, 32, 1>}, {transform_indices = @transform_4, window_bounds = array<i64: 8, 512>}]} {
    %c0 = arith.constant 0 : index
    %c0_0 = arith.constant 0 : index
    %0 = vector.load %arg2[%c0, %c0_0] : memref<32x8xf32, #tpu.memory_space<vmem>>, vector<32x8xf32>
    %c0_1 = arith.constant 0 : index
    %c0_2 = arith.constant 0 : index
    %1 = vector.load %arg1[%c0_1, %c0_2] : memref<8x512xf32, #tpu.memory_space<vmem>>, vector<8x512xf32>
    %cst = arith.constant dense<0.000000e+00> : vector<32x512xf32>
    %2 = tpu.matmul %0, %1, %cst {dimension_numbers = #tpu.dot_dimension_numbers<[1], [0], [0], [1], [0, 0, 1, 1], [], []>} : vector<32x8xf32>, vector<8x512xf32>, vector<32x512xf32> -> vector<32x512xf32>
    %c0_3 = arith.constant 0 : index
    %c0_4 = arith.constant 0 : index
    %c0_5 = arith.constant 0 : index
    %3 = vector.load %arg4[%c0_3, %c0_4, %c0_5] : memref<4x32x1xf32, #tpu.memory_space<vmem>>, vector<1x32x1xf32>
    %4 = vector.shape_cast %3 : vector<1x32x1xf32> to vector<32x1xf32>
    %5 = vector.broadcast %4 : vector<32x1xf32> to vector<32x512xf32>
    %6 = arith.addf %2, %5 : vector<32x512xf32>
    %cst_6 = arith.constant 0.000000e+00 : f32
    %7 = vector.broadcast %cst_6 : f32 to vector<32x512xf32>
    %8 = arith.maximumf %6, %7 : vector<32x512xf32>
    %c0_7 = arith.constant 0 : index
    %c0_8 = arith.constant 0 : index
    %c0_9 = arith.constant 0 : index
    %9 = vector.load %arg3[%c0_7, %c0_8, %c0_9] : memref<3x32x32xf32, #tpu.memory_space<vmem>>, vector<1x32x32xf32>
    %10 = vector.shape_cast %9 : vector<1x32x32xf32> to vector<32x32xf32>
    %cst_10 = arith.constant dense<0.000000e+00> : vector<32x512xf32>
    %11 = tpu.matmul %10, %8, %cst_10 {dimension_numbers = #tpu.dot_dimension_numbers<[1], [0], [0], [1], [0, 0, 1, 1], [], []>} : vector<32x32xf32>, vector<32x512xf32>, vector<32x512xf32> -> vector<32x512xf32>
    %c1 = arith.constant 1 : index
    %c0_11 = arith.constant 0 : index
    %c0_12 = arith.constant 0 : index
    %12 = vector.load %arg4[%c1, %c0_11, %c0_12] : memref<4x32x1xf32, #tpu.memory_space<vmem>>, vector<1x32x1xf32>
    %13 = vector.shape_cast %12 : vector<1x32x1xf32> to vector<32x1xf32>
    %14 = vector.broadcast %13 : vector<32x1xf32> to vector<32x512xf32>
    %15 = arith.addf %11, %14 : vector<32x512xf32>
    %cst_13 = arith.constant 0.000000e+00 : f32
    %16 = vector.broadcast %cst_13 : f32 to vector<32x512xf32>
    %17 = arith.maximumf %15, %16 : vector<32x512xf32>
    %c1_14 = arith.constant 1 : index
    %c0_15 = arith.constant 0 : index
    %c0_16 = arith.constant 0 : index
    %18 = vector.load %arg3[%c1_14, %c0_15, %c0_16] : memref<3x32x32xf32, #tpu.memory_space<vmem>>, vector<1x32x32xf32>
    %19 = vector.shape_cast %18 : vector<1x32x32xf32> to vector<32x32xf32>
    %cst_17 = arith.constant dense<0.000000e+00> : vector<32x512xf32>
    %20 = tpu.matmul %19, %17, %cst_17 {dimension_numbers = #tpu.dot_dimension_numbers<[1], [0], [0], [1], [0, 0, 1, 1], [], []>} : vector<32x32xf32>, vector<32x512xf32>, vector<32x512xf32> -> vector<32x512xf32>
    %c2 = arith.constant 2 : index
    %c0_18 = arith.constant 0 : index
    %c0_19 = arith.constant 0 : index
    %21 = vector.load %arg4[%c2, %c0_18, %c0_19] : memref<4x32x1xf32, #tpu.memory_space<vmem>>, vector<1x32x1xf32>
    %22 = vector.shape_cast %21 : vector<1x32x1xf32> to vector<32x1xf32>
    %23 = vector.broadcast %22 : vector<32x1xf32> to vector<32x512xf32>
    %24 = arith.addf %20, %23 : vector<32x512xf32>
    %cst_20 = arith.constant 0.000000e+00 : f32
    %25 = vector.broadcast %cst_20 : f32 to vector<32x512xf32>
    %26 = arith.maximumf %24, %25 : vector<32x512xf32>
    %c2_21 = arith.constant 2 : index
    %c0_22 = arith.constant 0 : index
    %c0_23 = arith.constant 0 : index
    %27 = vector.load %arg3[%c2_21, %c0_22, %c0_23] : memref<3x32x32xf32, #tpu.memory_space<vmem>>, vector<1x32x32xf32>
    %28 = vector.shape_cast %27 : vector<1x32x32xf32> to vector<32x32xf32>
    %cst_24 = arith.constant dense<0.000000e+00> : vector<32x512xf32>
    %29 = tpu.matmul %28, %26, %cst_24 {dimension_numbers = #tpu.dot_dimension_numbers<[1], [0], [0], [1], [0, 0, 1, 1], [], []>} : vector<32x32xf32>, vector<32x512xf32>, vector<32x512xf32> -> vector<32x512xf32>
    %c3 = arith.constant 3 : index
    %c0_25 = arith.constant 0 : index
    %c0_26 = arith.constant 0 : index
    %30 = vector.load %arg4[%c3, %c0_25, %c0_26] : memref<4x32x1xf32, #tpu.memory_space<vmem>>, vector<1x32x1xf32>
    %31 = vector.shape_cast %30 : vector<1x32x1xf32> to vector<32x1xf32>
    %32 = vector.broadcast %31 : vector<32x1xf32> to vector<32x512xf32>
    %33 = arith.addf %29, %32 : vector<32x512xf32>
    %34 = vector.extract_strided_slice %33 {offsets = [0, 0], sizes = [8, 512], strides = [1, 1]} : vector<32x512xf32> to vector<8x512xf32>
    %c0_27 = arith.constant 0 : index
    %c0_28 = arith.constant 0 : index
    %35 = vector.load %arg5[%c0_27, %c0_28] : memref<8x512xf32, #tpu.memory_space<vmem>>, vector<8x512xf32>
    tpu.vector_store %arg5[%c0_27, %c0_28], %34 {strides = array<i32>} : memref<8x512xf32, #tpu.memory_space<vmem>>, vector<8x512xf32>,
    return
  }
  func.func @transform_0(%arg0: i32) -> (i32, i32) {
    %c0_i32 = arith.constant 0 : i32
    %c0_i32_0 = arith.constant 0 : i32
    return %c0_i32, %arg0 : i32, i32
  }
  func.func @transform_1(%arg0: i32) -> (i32, i32) {
    %c0_i32 = arith.constant 0 : i32
    %c0_i32_0 = arith.constant 0 : i32
    %c0_i32_1 = arith.constant 0 : i32
    return %c0_i32, %c0_i32_0 : i32, i32
  }
  func.func @transform_2(%arg0: i32) -> (i32, i32, i32) {
    %c0_i32 = arith.constant 0 : i32
    %c0_i32_0 = arith.constant 0 : i32
    %c0_i32_1 = arith.constant 0 : i32
    %c0_i32_2 = arith.constant 0 : i32
    return %c0_i32, %c0_i32_0, %c0_i32_1 : i32, i32, i32
  }
  func.func @transform_3(%arg0: i32) -> (i32, i32, i32) {
    %c0_i32 = arith.constant 0 : i32
    %c0_i32_0 = arith.constant 0 : i32
    %c0_i32_1 = arith.constant 0 : i32
    %c0_i32_2 = arith.constant 0 : i32
    return %c0_i32, %c0_i32_0, %c0_i32_1 : i32, i32, i32
  }
  func.func @transform_4(%arg0: i32) -> (i32, i32) {
    %c0_i32 = arith.constant 0 : i32
    %c0_i32_0 = arith.constant 0 : i32
    return %c0_i32, %arg0 : i32, i32
  }
}

</mosaic_0001>

<llo_original>
// kernel: tpu_custom_call.1
$region0: #{tpu_custom_call.1}
  #allocation0 [shape = 'u32[]', space=smem, size = 0x4, offset = 0x4, fixed_abs, tag = 'smem constant byte address 0x4 - core index']
  #allocation1 [shape = 'u32[144,128]{1,0:T(1,128)}', space=vmem, size = 0x12000, scoped, tag = 'internal scratch']
  %s0 = inlined_call_operand.vmem [shape: f32[8,1024], index: 0, kind: input, shape index: {}]
  %s1 = inlined_call_operand.vmem [shape: f32[32,8], index: 1, kind: input, shape index: {}]
  %s2 = inlined_call_operand.vmem [shape: f32[3,32,32], index: 2, kind: input, shape index: {}]
  %s3 = inlined_call_operand.vmem [shape: f32[4,32,1], index: 3, kind: input, shape index: {}]
  %s4 = inlined_call_operand.hbm [shape: f32[8,1024], index: 4, kind: output, shape index: {}]
  %s5 = sld [smem:[#allocation0]]
  $region49: #{tpu_custom_call.1} parent=0
    _
  %s7 = ssub.s32 1, %s5
  %s8 = scalar_select 0, %s7, %s5
  $region1: #{tpu_custom_call.1} parent=0
    #allocation2 [shape = 'u8[32768]{0}', space=vmem, size = 0x8000, scoped, tag = 'output window, operand 0']
    #allocation3 [shape = 's32[2]{0}', space=sflag, size = 0x8, scoped, tag = 'scoped memory for tpu_custom_call.1']
    %9 = vsyncpa [#allocation3], 0
    %s10 = scalar_lea.sflag [#allocation3], 1
    %11 = vsyncpa %s10, 0
    loop: start=0, step=1, limit=4
    $region2: #{tpu_custom_call.1} parent=1 // loop_pre_header
      _
    $region3: #{tpu_custom_call.1} parent=1 // loop_header
      %s13 = sphi 0, %s17
      %p14 = scmp.ge.s32.totalorder %s13, 4
      %s23 = sphi 0, %s25
      %s26 = sphi 0, %s23
      %s27 = sphi 0, %s26
      %s43 = sphi 0, %s27
      %s47 = sphi 0, %s47
      %s49 = sphi 0, %s47
      %s50 = sphi 0, %s49
      %s64 = sphi 0, %s50
      %s68 = sphi 0, %s68
      %s70 = sphi 0, %s68
      %s71 = sphi 0, %s70
      %s85 = sphi 0, %s71
      %s89 = sphi 0, %s89
      %s91 = sphi 0, %s89
      %s92 = sphi 0, %s91
      %s106 = sphi 0, %s92
      %s112 = sphi 0, %s114
      %s115 = sphi 0, %s112
      %s116 = sphi 0, %s115
      %s132 = sphi 0, %s116
    $region4: #{tpu_custom_call.1} parent=1 // loop_header_branch
      %16 = sbr.rel (%p14) target = $region8
    $region5: #{tpu_custom_call.1} parent=1 // loop_body
      %s18 = ssub.s32 %s13, 1
      %s19 = ssub.s32 %s13, 2
      %s20 = sadd.s32 %s13, 1
      %s21 = ssub.s32 %s13, %s20
      %p22 = scmp.eq.s32.totalorder %s21, 0
      %s24 = sadd.s32 %s23, 1
      %s25 = scalar_select %p22, %s23, %s24
      %p28 = pneg %p22
      %p29 = scmp.eq.s32.totalorder %s13, 1
      %p30 = por %p28, %p29
      %p31 = scmp.ne.s32.totalorder %s23, %s26
      %p32 = scmp.eq.s32.totalorder %s13, 0
      %p33 = por %p31, %p32
      %p34 = scmp.ne.s32.totalorder %s23, %s26
      %p35 = scmp.eq.s32.totalorder %s18, 1
      %p36 = por %p34, %p35
      %p37 = scmp.ne.s32.totalorder %s26, %s27
      %p38 = scmp.eq.s32.totalorder %s18, 0
      %p39 = por %p37, %p38
      %p40 = scmp.ne.s32.totalorder %s26, %s27
      %p41 = scmp.eq.s32.totalorder %s19, 1
      %p42 = por %p40, %p41
      %p44 = scmp.ne.s32.totalorder %s27, %s43
      %p45 = scmp.eq.s32.totalorder %s19, 0
      %p46 = por %p44, %p45
      %s48 = sadd.s32 %s47, 1
      %p51 = scmp.eq.s32.totalorder %s13, 1
      %p52 = scmp.ne.s32.totalorder %s47, %s49
      %p53 = scmp.eq.s32.totalorder %s13, 0
      %p54 = por %p52, %p53
      %p55 = scmp.ne.s32.totalorder %s47, %s49
      %p56 = scmp.eq.s32.totalorder %s18, 1
      %p57 = por %p55, %p56
      %p58 = scmp.ne.s32.totalorder %s49, %s50
      %p59 = scmp.eq.s32.totalorder %s18, 0
      %p60 = por %p58, %p59
      %p61 = scmp.ne.s32.totalorder %s49, %s50
      %p62 = scmp.eq.s32.totalorder %s19, 1
      %p63 = por %p61, %p62
      %p65 = scmp.ne.s32.totalorder %s50, %s64
      %p66 = scmp.eq.s32.totalorder %s19, 0
      %p67 = por %p65, %p66
      %s69 = sadd.s32 %s68, 1
      %p72 = scmp.eq.s32.totalorder %s13, 1
      %p73 = scmp.ne.s32.totalorder %s68, %s70
      %p74 = scmp.eq.s32.totalorder %s13, 0
      %p75 = por %p73, %p74
      %p76 = scmp.ne.s32.totalorder %s68, %s70
      %p77 = scmp.eq.s32.totalorder %s18, 1
      %p78 = por %p76, %p77
      %p79 = scmp.ne.s32.totalorder %s70, %s71
      %p80 = scmp.eq.s32.totalorder %s18, 0
      %p81 = por %p79, %p80
      %p82 = scmp.ne.s32.totalorder %s70, %s71
      %p83 = scmp.eq.s32.totalorder %s19, 1
      %p84 = por %p82, %p83
      %p86 = scmp.ne.s32.totalorder %s71, %s85
      %p87 = scmp.eq.s32.totalorder %s19, 0
      %p88 = por %p86, %p87
      %s90 = sadd.s32 %s89, 1
      %p93 = scmp.eq.s32.totalorder %s13, 1
      %p94 = scmp.ne.s32.totalorder %s89, %s91
      %p95 = scmp.eq.s32.totalorder %s13, 0
      %p96 = por %p94, %p95
      %p97 = scmp.ne.s32.totalorder %s89, %s91
      %p98 = scmp.eq.s32.totalorder %s18, 1
      %p99 = por %p97, %p98
      %p100 = scmp.ne.s32.totalorder %s91, %s92
      %p101 = scmp.eq.s32.totalorder %s18, 0
      %p102 = por %p100, %p101
      %p103 = scmp.ne.s32.totalorder %s91, %s92
      %p104 = scmp.eq.s32.totalorder %s19, 1
      %p105 = por %p103, %p104
      %p107 = scmp.ne.s32.totalorder %s92, %s106
      %p108 = scmp.eq.s32.totalorder %s19, 0
      %p109 = por %p107, %p108
      %s110 = ssub.s32 %s13, %s20
      %p111 = scmp.eq.s32.totalorder %s110, 0
      %s113 = sadd.s32 %s112, 1
      %s114 = scalar_select %p111, %s112, %s113
      %p117 = pneg %p111
      %p118 = scmp.eq.s32.totalorder %s13, 1
      %p119 = por %p117, %p118
      %p120 = scmp.ne.s32.totalorder %s112, %s115
      %p121 = scmp.eq.s32.totalorder %s13, 0
      %p122 = por %p120, %p121
      %p123 = scmp.ne.s32.totalorder %s112, %s115
      %p124 = scmp.eq.s32.totalorder %s18, 1
      %p125 = por %p123, %p124
      %p126 = scmp.ne.s32.totalorder %s115, %s116
      %p127 = scmp.eq.s32.totalorder %s18, 0
      %p128 = por %p126, %p127
      %p129 = scmp.ne.s32.totalorder %s115, %s116
      %p130 = scmp.eq.s32.totalorder %s19, 1
      %p131 = por %p129, %p130
      %p133 = scmp.ne.s32.totalorder %s116, %s132
      %p134 = scmp.eq.s32.totalorder %s19, 0
      %p135 = por %p133, %p134
      %p136 = scmp.le.s32.totalorder 1, %s13
      %p137 = scmp.lt.s32.totalorder %s13, 3
      %p138 = pnand %p136, %p137
      %p139 = pneg %p138
      // Predicated region
      $region9: #{tpu_custom_call.1} parent=5 // pred_check
        _
      $region10: #{tpu_custom_call.1} parent=5 // pred_check_branch
        %141 = sbr.rel (%p138) target = $region12
      $region11: #{tpu_custom_call.1} parent=5 // pred_region
        %s142 = ssub.s32 %s13, 1
        // Predicated region
        $region13: #{tpu_custom_call.1} parent=11 // pred_check
          %p143 = pneg %p60
        $region14: #{tpu_custom_call.1} parent=11 // pred_check_branch
          %145 = sbr.rel (%p143) target = $region16
        $region15: #{tpu_custom_call.1} parent=11 // pred_region
          _
        $region16: #{tpu_custom_call.1} parent=11 // pred_fallthru
          _
        // Predicated region
        $region17: #{tpu_custom_call.1} parent=11 // pred_check
          %p146 = pneg %p81
        $region18: #{tpu_custom_call.1} parent=11 // pred_check_branch
          %148 = sbr.rel (%p146) target = $region20
        $region19: #{tpu_custom_call.1} parent=11 // pred_region
          _
        $region20: #{tpu_custom_call.1} parent=11 // pred_fallthru
          _
        // Predicated region
        $region21: #{tpu_custom_call.1} parent=11 // pred_check
          %p149 = pneg %p102
        $region22: #{tpu_custom_call.1} parent=11 // pred_check_branch
          %151 = sbr.rel (%p149) target = $region24
        $region23: #{tpu_custom_call.1} parent=11 // pred_region
          _
        $region24: #{tpu_custom_call.1} parent=11 // pred_fallthru
          _
      $region12: #{tpu_custom_call.1} parent=5 // pred_fallthru
        _
      %p152 = scmp.lt.s32.totalorder %s13, 2
      // Predicated region
      $region25: #{tpu_custom_call.1} parent=5 // pred_check
        %p153 = pneg %p152
      $region26: #{tpu_custom_call.1} parent=5 // pred_check_branch
        %155 = sbr.rel (%p153) target = $region28
      $region27: #{tpu_custom_call.1} parent=5 // pred_region
        // Predicated region
        $region29: #{tpu_custom_call.1} parent=27 // pred_check
          %p156 = pneg %p33
        $region30: #{tpu_custom_call.1} parent=27 // pred_check_branch
          %158 = sbr.rel (%p156) target = $region32
        $region31: #{tpu_custom_call.1} parent=27 // pred_region
          %s159 = smul.u32 4, %s13
          %p160 = scmp.lt.s32.totalorder %s159, 7
          %s161 = scalar_select %p160, %s159, 7
          %s162 = smul.addr %s161, 8
          %s163 = scalar_lea.vmem %s0, %s162
          %s164 = smul.u32 4, %s13
        $region32: #{tpu_custom_call.1} parent=27 // pred_fallthru
          _
      $region28: #{tpu_custom_call.1} parent=5 // pred_fallthru
        _
      %p165 = scmp.le.s32.totalorder 1, %s13
      %p166 = scmp.lt.s32.totalorder %s13, 3
      %p167 = pnand %p165, %p166
      %p168 = pneg %p167
      // Predicated region
      $region33: #{tpu_custom_call.1} parent=5 // pred_check
        _
      $region34: #{tpu_custom_call.1} parent=5 // pred_check_branch
        %170 = sbr.rel (%p167) target = $region36
      $region35: #{tpu_custom_call.1} parent=5 // pred_region
        %s171 = ssub.s32 %s13, 1
        %s172 = smul.u32 4, %s18
        %p173 = scmp.lt.s32.totalorder %s172, 7
        %s174 = scalar_select %p173, %s172, 7
        %s175 = smul.addr %s174, 8
        %s176 = scalar_lea.vmem %s0, %s175
        %p177 = pneg %p39
        %p178 = pneg %p36
        %p179 = pneg %p60
        %p180 = pneg %p57
        %p181 = pneg %p81
        %p182 = pneg %p78
        %p183 = pneg %p102
        %p184 = pneg %p99
        %p185 = pneg %p128
        %p186 = pneg %p125
        %s187 = sand.u32 %s115, 1
        %s188 = scalar_lea.sflag [#allocation3], %s187
        %s189 = sand.u32 %s115, 1
        %s190 = smul.addr %s189, 32
        %s191 = scalar_lea.vmem [#allocation2], %s190
        %s192 = smul.u32 4, %s18
        %p193 = scmp.lt.s32.totalorder %s192, 7
        %s194 = scalar_select %p193, %s192, 7
        %s195 = smul.addr %s194, 8
        %s196 = scalar_lea.vmem %s0, %s195
        %s197 = smul.u32 4, %s18
        %s198 = smul.u32 4, %s18
        %v199 = vld [vmem:[%s1] sm:$0xff]
        %v200 = vld [vmem:[%s1 + $0x8] sm:$0xff]
        %v201 = vld [vmem:[%s1 + $0x10] sm:$0xff]
        %v202 = vld [vmem:[%s1 + $0x18] sm:$0xff]
        %v203 = vld [vmem:[%s196] sm:$0xff]
        %v204 = vld [vmem:[%s196 + $0x8] sm:$0xff]
        %v205 = vld [vmem:[%s196 + $0x10] sm:$0xff]
        %v206 = vld [vmem:[%s196 + $0x18] sm:$0xff]
        %v207 = vld [vmem:[%s3] sm:$0xff]
        %v208 = vld [vmem:[%s3 + $0x8] sm:$0xff]
        %v209 = vld [vmem:[%s3 + $0x10] sm:$0xff]
        %v210 = vld [vmem:[%s3 + $0x18] sm:$0xff]
        %212 = vset.pattern.permute.xlu0 0
        %213 = vperm.xlu0 %212, %v207
        %v214 = vpop.permute.xlu0 %213
        %217 = vset.pattern.permute.xlu0 0
        %218 = vperm.xlu0 %217, %v208
        %v219 = vpop.permute.xlu0 %218
        %222 = vset.pattern.permute.xlu0 0
        %223 = vperm.xlu0 %222, %v209
        %v224 = vpop.permute.xlu0 %223
        %227 = vset.pattern.permute.xlu0 0
        %228 = vperm.xlu0 %227, %v210
        %v229 = vpop.permute.xlu0 %228
        %vm231 = vcmask 64512
        %v233 = vsel %vm231, %v199, 0
        %v236 = vsel %vm231, %v200, 0
        %v239 = vsel %vm231, %v201, 0
        %v242 = vsel %vm231, %v202, 0
        %244 = vmatprep.subr.mxu0 %v204
        %245 = vmatpush1.msra.mxu0 %v203
        %246 = vmatprep.subr.mxu0 0.0
        %247 = vmatpush1.msra.mxu0 0.0
        %248 = vmatprep.subr.mxu0 0.0
        %249 = vmatpush1.msra.mxu0 0.0
        %250 = vmatprep.subr.mxu0 0.0
        %251 = vmatpush1.msra.mxu0 0.0
        %252 = vmatprep.subr.mxu0 0.0
        %253 = vmatpush1.msra.mxu0 0.0
        %254 = vmatprep.subr.mxu0 0.0
        %255 = vmatpush1.msra.mxu0 0.0
        %256 = vmatprep.subr.mxu0 0.0
        %257 = vmatpush1.msra.mxu0 0.0
        %258 = vmatprep.subr.mxu0 0.0
        %259 = vmatpush1.msra.mxu0 0.0
        %260 = vmatprep.subr.mxu0 0.0
        %261 = vmatpush1.msra.mxu0 0.0
        %262 = vmatprep.subr.mxu0 0.0
        %263 = vmatpush1.msra.mxu0 0.0
        %264 = vmatprep.subr.mxu0 0.0
        %265 = vmatpush1.msra.mxu0 0.0
        %266 = vmatprep.subr.mxu0 0.0
        %267 = vmatpush1.msra.mxu0 0.0
        %268 = vmatprep.subr.mxu0 0.0
        %269 = vmatpush1.msra.mxu0 0.0
        %270 = vmatprep.subr.mxu0 0.0
        %271 = vmatpush1.msra.mxu0 0.0
        %272 = vmatprep.subr.mxu0 0.0
        %273 = vmatpush1.msra.mxu0 0.0
        %274 = vmatprep.subr.mxu0 0.0
        %275 = vmatpush1.msra.mxu0 0.0
        %276 = vmatprep.subr.mxu0 0.0
        %277 = vmatpush1.msra.mxu0 0.0
        %278 = vmatprep.subr.mxu0 0.0
        %279 = vmatpush1.msra.mxu0 0.0
        %280 = vmatprep.subr.mxu0 0.0
        %281 = vmatpush1.msra.mxu0 0.0
        %282 = vmatprep.subr.mxu0 0.0
        %283 = vmatpush1.msra.mxu0 0.0
        %284 = vmatprep.subr.mxu0 0.0
        %285 = vmatpush1.msra.mxu0 0.0
        %286 = vmatprep.subr.mxu0 0.0
        %287 = vmatpush1.msra.mxu0 0.0
        %288 = vmatprep.subr.mxu0 0.0
        %289 = vmatpush1.msra.mxu0 0.0
        %290 = vmatprep.subr.mxu0 0.0
        %291 = vmatpush1.msra.mxu0 0.0
        %292 = vmatprep.subr.mxu0 0.0
        %293 = vmatpush1.msra.mxu0 0.0
        %294 = vmatprep.subr.mxu0 0.0
        %295 = vmatpush1.msra.mxu0 0.0
        %296 = vmatprep.subr.mxu0 0.0
        %297 = vmatpush1.msra.mxu0 0.0
        %298 = vmatprep.subr.mxu0 0.0
        %299 = vmatpush1.msra.mxu0 0.0
        %300 = vmatprep.subr.mxu0 0.0
        %301 = vmatpush1.msra.mxu0 0.0
        %302 = vmatprep.subr.mxu0 0.0
        %303 = vmatpush1.msra.mxu0 0.0
        %304 = vmatprep.subr.mxu0 0.0
        %305 = vmatpush1.msra.mxu0 0.0
        %306 = vmatprep.subr.mxu0 0.0
        %307 = vmatpush1.msra.mxu0 0.0
        %308 = vmatprep.mubr.f32.mxu0 0.0
        %309 = vmatmul.mubr.f32.gmra.mrb[0].mxu0 %v233
        %v310 = vpop.f32.mrb[0].mxu0
        %v311 = vadd.f32 %v214, %v310
        %v312 = vpop.f32.mrb[0].mxu0
        %v313 = vadd.f32 %v214, %v312
        %314 = vmatprep.mubr.f32.mxu0 0.0
        %315 = vmatmul.mubr.f32.gmra.mrb[0].mxu0 %v236
        %v316 = vpop.f32.mrb[0].mxu0
        %v317 = vadd.f32 %v219, %v316
        %v318 = vpop.f32.mrb[0].mxu0
        %v319 = vadd.f32 %v219, %v318
        %320 = vmatprep.mubr.f32.mxu0 0.0
        %321 = vmatmul.mubr.f32.gmra.mrb[0].mxu0 %v239
        %v322 = vpop.f32.mrb[0].mxu0
        %v323 = vadd.f32 %v224, %v322
        %v324 = vpop.f32.mrb[0].mxu0
        %v325 = vadd.f32 %v224, %v324
        %326 = vmatprep.mubr.f32.mxu0 0.0
        %327 = vmatmul.mubr.f32.gmra.mrb[0].mxu0 %v242
        %v328 = vpop.f32.mrb[0].mxu0
        %v329 = vadd.f32 %v229, %v328
        %v330 = vpop.f32.mrb[0].mxu0
        %v331 = vadd.f32 %v229, %v330
        %332 = vdwg.mxu0
        %333 = vmatprep.subr.mxu0 %v206
        %334 = vmatpush1.msra.mxu0 %v205
        %335 = vmatprep.subr.mxu0 0.0
        %336 = vmatpush1.msra.mxu0 0.0
        %337 = vmatprep.subr.mxu0 0.0
        %338 = vmatpush1.msra.mxu0 0.0
        %339 = vmatprep.subr.mxu0 0.0
        %340 = vmatpush1.msra.mxu0 0.0
        %341 = vmatprep.subr.mxu0 0.0
        %342 = vmatpush1.msra.mxu0 0.0
        %343 = vmatprep.subr.mxu0 0.0
        %344 = vmatpush1.msra.mxu0 0.0
        %345 = vmatprep.subr.mxu0 0.0
        %346 = vmatpush1.msra.mxu0 0.0
        %347 = vmatprep.subr.mxu0 0.0
        %348 = vmatpush1.msra.mxu0 0.0
        %349 = vmatprep.subr.mxu0 0.0
        %350 = vmatpush1.msra.mxu0 0.0
        %351 = vmatprep.subr.mxu0 0.0
        %352 = vmatpush1.msra.mxu0 0.0
        %353 = vmatprep.subr.mxu0 0.0
        %354 = vmatpush1.msra.mxu0 0.0
        %355 = vmatprep.subr.mxu0 0.0
        %356 = vmatpush1.msra.mxu0 0.0
        %357 = vmatprep.subr.mxu0 0.0
        %358 = vmatpush1.msra.mxu0 0.0
        %359 = vmatprep.subr.mxu0 0.0
        %360 = vmatpush1.msra.mxu0 0.0
        %361 = vmatprep.subr.mxu0 0.0
        %362 = vmatpush1.msra.mxu0 0.0
        %363 = vmatprep.subr.mxu0 0.0
        %364 = vmatpush1.msra.mxu0 0.0
        %365 = vmatprep.subr.mxu0 0.0
        %366 = vmatpush1.msra.mxu0 0.0
        %367 = vmatprep.subr.mxu0 0.0
        %368 = vmatpush1.msra.mxu0 0.0
        %369 = vmatprep.subr.mxu0 0.0
        %370 = vmatpush1.msra.mxu0 0.0
        %371 = vmatprep.subr.mxu0 0.0
        %372 = vmatpush1.msra.mxu0 0.0
        %373 = vmatprep.subr.mxu0 0.0
        %374 = vmatpush1.msra.mxu0 0.0
        %375 = vmatprep.subr.mxu0 0.0
        %376 = vmatpush1.msra.mxu0 0.0
        %377 = vmatprep.subr.mxu0 0.0
        %378 = vmatpush1.msra.mxu0 0.0
        %379 = vmatprep.subr.mxu0 0.0
        %380 = vmatpush1.msra.mxu0 0.0
        %381 = vmatprep.subr.mxu0 0.0
        %382 = vmatpush1.msra.mxu0 0.0
        %383 = vmatprep.subr.mxu0 0.0
        %384 = vmatpush1.msra.mxu0 0.0
        %385 = vmatprep.subr.mxu0 0.0
        %386 = vmatpush1.msra.mxu0 0.0
        %387 = vmatprep.subr.mxu0 0.0
        %388 = vmatpush1.msra.mxu0 0.0
        %389 = vmatprep.subr.mxu0 0.0
        %390 = vmatpush1.msra.mxu0 0.0
        %391 = vmatprep.subr.mxu0 0.0
        %392 = vmatpush1.msra.mxu0 0.0
        %393 = vmatprep.subr.mxu0 0.0
        %394 = vmatpush1.msra.mxu0 0.0
        %395 = vmatprep.subr.mxu0 0.0
        %396 = vmatpush1.msra.mxu0 0.0
        %397 = vmatprep.mubr.f32.mxu0 0.0
        %398 = vmatmul.mubr.f32.gmra.mrb[0].mxu0 %v233
        %v399 = vpop.f32.mrb[0].mxu0
        %v400 = vadd.f32 %v214, %v399
        %v401 = vpop.f32.mrb[0].mxu0
        %v402 = vadd.f32 %v214, %v401
        %403 = vmatprep.mubr.f32.mxu0 0.0
        %404 = vmatmul.mubr.f32.gmra.mrb[0].mxu0 %v236
        %v405 = vpop.f32.mrb[0].mxu0
        %v406 = vadd.f32 %v219, %v405
        %v407 = vpop.f32.mrb[0].mxu0
        %v408 = vadd.f32 %v219, %v407
        %409 = vmatprep.mubr.f32.mxu0 0.0
        %410 = vmatmul.mubr.f32.gmra.mrb[0].mxu0 %v239
        %v411 = vpop.f32.mrb[0].mxu0
        %v412 = vadd.f32 %v224, %v411
        %v413 = vpop.f32.mrb[0].mxu0
        %v414 = vadd.f32 %v224, %v413
        %415 = vmatprep.mubr.f32.mxu0 0.0
        %416 = vmatmul.mubr.f32.gmra.mrb[0].mxu0 %v242
        %v417 = vpop.f32.mrb[0].mxu0
        %v418 = vadd.f32 %v229, %v417
        %v419 = vpop.f32.mrb[0].mxu0
        %v420 = vadd.f32 %v229, %v419
        %421 = vdwg.mxu0
        %v422 = vmax.f32 %v311, 0.0
        %v423 = vmax.f32 %v313, 0.0
        %v424 = vmax.f32 %v400, 0.0
        %v425 = vmax.f32 %v402, 0.0
        %v426 = vmax.f32 %v317, 0.0
        %v427 = vmax.f32 %v319, 0.0
        %v428 = vmax.f32 %v406, 0.0
        %v429 = vmax.f32 %v408, 0.0
        %v430 = vmax.f32 %v323, 0.0
        %v431 = vmax.f32 %v325, 0.0
        %v432 = vmax.f32 %v412, 0.0
        %v433 = vmax.f32 %v414, 0.0
        %v434 = vmax.f32 %v329, 0.0
        %v435 = vmax.f32 %v331, 0.0
        %v436 = vmax.f32 %v418, 0.0
        %v437 = vmax.f32 %v420, 0.0
        %v438 = vld [vmem:[%s2] sm:$0xff]
        %v439 = vld [vmem:[%s2 + $0x8] sm:$0xff]
        %v440 = vld [vmem:[%s2 + $0x10] sm:$0xff]
        %v441 = vld [vmem:[%s2 + $0x18] sm:$0xff]
        %s442 = scalar_lea.vmem %s3, 32
        %v443 = vld [vmem:[%s442] sm:$0xff]
        %v444 = vld [vmem:[%s442 + $0x8] sm:$0xff]
        %v445 = vld [vmem:[%s442 + $0x10] sm:$0xff]
        %v446 = vld [vmem:[%s442 + $0x18] sm:$0xff]
        %448 = vset.pattern.permute.xlu0 0
        %449 = vperm.xlu0 %448, %v443
        %v450 = vpop.permute.xlu0 %449
        %453 = vset.pattern.permute.xlu0 0
        %454 = vperm.xlu0 %453, %v444
        %v455 = vpop.permute.xlu0 %454
        %458 = vset.pattern.permute.xlu0 0
        %459 = vperm.xlu0 %458, %v445
        %v460 = vpop.permute.xlu0 %459
        %463 = vset.pattern.permute.xlu0 0
        %464 = vperm.xlu0 %463, %v446
        %v465 = vpop.permute.xlu0 %464
        %vm467 = vcmask 261120
        %v469 = vsel %vm467, %v438, 0
        %v472 = vsel %vm467, %v439, 0
        %v475 = vsel %vm467, %v440, 0
        %v478 = vsel %vm467, %v441, 0
        %480 = vmatprep.subr.mxu0 %v423
        %481 = vmatpush1.msra.mxu0 %v422
        %482 = vmatprep.subr.mxu0 %v427
        %483 = vmatpush1.msra.mxu0 %v426
        %484 = vmatprep.subr.mxu0 %v431
        %485 = vmatpush1.msra.mxu0 %v430
        %486 = vmatprep.subr.mxu0 %v435
        %487 = vmatpush1.msra.mxu0 %v434
        %488 = vmatprep.subr.mxu0 0.0
        %489 = vmatpush1.msra.mxu0 0.0
        %490 = vmatprep.subr.mxu0 0.0
        %491 = vmatpush1.msra.mxu0 0.0
        %492 = vmatprep.subr.mxu0 0.0
        %493 = vmatpush1.msra.mxu0 0.0
        %494 = vmatprep.subr.mxu0 0.0
        %495 = vmatpush1.msra.mxu0 0.0
        %496 = vmatprep.subr.mxu0 0.0
        %497 = vmatpush1.msra.mxu0 0.0
        %498 = vmatprep.subr.mxu0 0.0
        %499 = vmatpush1.msra.mxu0 0.0
        %500 = vmatprep.subr.mxu0 0.0
        %501 = vmatpush1.msra.mxu0 0.0
        %502 = vmatprep.subr.mxu0 0.0
        %503 = vmatpush1.msra.mxu0 0.0
        %504 = vmatprep.subr.mxu0 0.0
        %505 = vmatpush1.msra.mxu0 0.0
        %506 = vmatprep.subr.mxu0 0.0
        %507 = vmatpush1.msra.mxu0 0.0
        %508 = vmatprep.subr.mxu0 0.0
        %509 = vmatpush1.msra.mxu0 0.0
        %510 = vmatprep.subr.mxu0 0.0
        %511 = vmatpush1.msra.mxu0 0.0
        %512 = vmatprep.subr.mxu0 0.0
        %513 = vmatpush1.msra.mxu0 0.0
        %514 = vmatprep.subr.mxu0 0.0
        %515 = vmatpush1.msra.mxu0 0.0
        %516 = vmatprep.subr.mxu0 0.0
        %517 = vmatpush1.msra.mxu0 0.0
        %518 = vmatprep.subr.mxu0 0.0
        %519 = vmatpush1.msra.mxu0 0.0
        %520 = vmatprep.subr.mxu0 0.0
        %521 = vmatpush1.msra.mxu0 0.0
        %522 = vmatprep.subr.mxu0 0.0
        %523 = vmatpush1.msra.mxu0 0.0
        %524 = vmatprep.subr.mxu0 0.0
        %525 = vmatpush1.msra.mxu0 0.0
        %526 = vmatprep.subr.mxu0 0.0
        %527 = vmatpush1.msra.mxu0 0.0
        %528 = vmatprep.subr.mxu0 0.0
        %529 = vmatpush1.msra.mxu0 0.0
        %530 = vmatprep.subr.mxu0 0.0
        %531 = vmatpush1.msra.mxu0 0.0
        %532 = vmatprep.subr.mxu0 0.0
        %533 = vmatpush1.msra.mxu0 0.0
        %534 = vmatprep.subr.mxu0 0.0
        %535 = vmatpush1.msra.mxu0 0.0
        %536 = vmatprep.subr.mxu0 0.0
        %537 = vmatpush1.msra.mxu0 0.0
        %538 = vmatprep.subr.mxu0 0.0
        %539 = vmatpush1.msra.mxu0 0.0
        %540 = vmatprep.subr.mxu0 0.0
        %541 = vmatpush1.msra.mxu0 0.0
        %542 = vmatprep.subr.mxu0 0.0
        %543 = vmatpush1.msra.mxu0 0.0
        %544 = vmatprep.mubr.f32.mxu0 0.0
        %545 = vmatmul.mubr.f32.gmra.mrb[0].mxu0 %v469
        %v546 = vpop.f32.mrb[0].mxu0
        %v547 = vadd.f32 %v450, %v546
        %v548 = vpop.f32.mrb[0].mxu0
        %v549 = vadd.f32 %v450, %v548
        %550 = vmatprep.mubr.f32.mxu0 0.0
        %551 = vmatmul.mubr.f32.gmra.mrb[0].mxu0 %v472
        %v552 = vpop.f32.mrb[0].mxu0
        %v553 = vadd.f32 %v455, %v552
        %v554 = vpop.f32.mrb[0].mxu0
        %v555 = vadd.f32 %v455, %v554
        %556 = vmatprep.mubr.f32.mxu0 0.0
        %557 = vmatmul.mubr.f32.gmra.mrb[0].mxu0 %v475
        %v558 = vpop.f32.mrb[0].mxu0
        %v559 = vadd.f32 %v460, %v558
        %v560 = vpop.f32.mrb[0].mxu0
        %v561 = vadd.f32 %v460, %v560
        %562 = vmatprep.mubr.f32.mxu0 0.0
        %563 = vmatmul.mubr.f32.gmra.mrb[0].mxu0 %v478
        %v564 = vpop.f32.mrb[0].mxu0
        %v565 = vadd.f32 %v465, %v564
        %v566 = vpop.f32.mrb[0].mxu0
        %v567 = vadd.f32 %v465, %v566
        %568 = vdwg.mxu0
        %569 = vmatprep.subr.mxu0 %v425
        %570 = vmatpush1.msra.mxu0 %v424
        %571 = vmatprep.subr.mxu0 %v429
        %572 = vmatpush1.msra.mxu0 %v428
        %573 = vmatprep.subr.mxu0 %v433
        %574 = vmatpush1.msra.mxu0 %v432
        %575 = vmatprep.subr.mxu0 %v437
        %576 = vmatpush1.msra.mxu0 %v436
        %577 = vmatprep.subr.mxu0 0.0
        %578 = vmatpush1.msra.mxu0 0.0
        %579 = vmatprep.subr.mxu0 0.0
        %580 = vmatpush1.msra.mxu0 0.0
        %581 = vmatprep.subr.mxu0 0.0
        %582 = vmatpush1.msra.mxu0 0.0
        %583 = vmatprep.subr.mxu0 0.0
        %584 = vmatpush1.msra.mxu0 0.0
        %585 = vmatprep.subr.mxu0 0.0
        %586 = vmatpush1.msra.mxu0 0.0
        %587 = vmatprep.subr.mxu0 0.0
        %588 = vmatpush1.msra.mxu0 0.0
        %589 = vmatprep.subr.mxu0 0.0
        %590 = vmatpush1.msra.mxu0 0.0
        %591 = vmatprep.subr.mxu0 0.0
        %592 = vmatpush1.msra.mxu0 0.0
        %593 = vmatprep.subr.mxu0 0.0
        %594 = vmatpush1.msra.mxu0 0.0
        %595 = vmatprep.subr.mxu0 0.0
        %596 = vmatpush1.msra.mxu0 0.0
        %597 = vmatprep.subr.mxu0 0.0
        %598 = vmatpush1.msra.mxu0 0.0
        %599 = vmatprep.subr.mxu0 0.0
        %600 = vmatpush1.msra.mxu0 0.0
        %601 = vmatprep.subr.mxu0 0.0
        %602 = vmatpush1.msra.mxu0 0.0
        %603 = vmatprep.subr.mxu0 0.0
        %604 = vmatpush1.msra.mxu0 0.0
        %605 = vmatprep.subr.mxu0 0.0
        %606 = vmatpush1.msra.mxu0 0.0
        %607 = vmatprep.subr.mxu0 0.0
        %608 = vmatpush1.msra.mxu0 0.0
        %609 = vmatprep.subr.mxu0 0.0
        %610 = vmatpush1.msra.mxu0 0.0
        %611 = vmatprep.subr.mxu0 0.0
        %612 = vmatpush1.msra.mxu0 0.0
        %613 = vmatprep.subr.mxu0 0.0
        %614 = vmatpush1.msra.mxu0 0.0
        %615 = vmatprep.subr.mxu0 0.0
        %616 = vmatpush1.msra.mxu0 0.0
        %617 = vmatprep.subr.mxu0 0.0
        %618 = vmatpush1.msra.mxu0 0.0
        %619 = vmatprep.subr.mxu0 0.0
        %620 = vmatpush1.msra.mxu0 0.0
        %621 = vmatprep.subr.mxu0 0.0
        %622 = vmatpush1.msra.mxu0 0.0
        %623 = vmatprep.subr.mxu0 0.0
        %624 = vmatpush1.msra.mxu0 0.0
        %625 = vmatprep.subr.mxu0 0.0
        %626 = vmatpush1.msra.mxu0 0.0
        %627 = vmatprep.subr.mxu0 0.0
        %628 = vmatpush1.msra.mxu0 0.0
        %629 = vmatprep.subr.mxu0 0.0
        %630 = vmatpush1.msra.mxu0 0.0
        %631 = vmatprep.subr.mxu0 0.0
        %632 = vmatpush1.msra.mxu0 0.0
        %633 = vmatprep.mubr.f32.mxu0 0.0
        %634 = vmatmul.mubr.f32.gmra.mrb[0].mxu0 %v469
        %v635 = vpop.f32.mrb[0].mxu0
        %v636 = vadd.f32 %v450, %v635
        %v637 = vpop.f32.mrb[0].mxu0
        %v638 = vadd.f32 %v450, %v637
        %639 = vmatprep.mubr.f32.mxu0 0.0
        %640 = vmatmul.mubr.f32.gmra.mrb[0].mxu0 %v472
        %v641 = vpop.f32.mrb[0].mxu0
        %v642 = vadd.f32 %v455, %v641
        %v643 = vpop.f32.mrb[0].mxu0
        %v644 = vadd.f32 %v455, %v643
        %645 = vmatprep.mubr.f32.mxu0 0.0
        %646 = vmatmul.mubr.f32.gmra.mrb[0].mxu0 %v475
        %v647 = vpop.f32.mrb[0].mxu0
        %v648 = vadd.f32 %v460, %v647
        %v649 = vpop.f32.mrb[0].mxu0
        %v650 = vadd.f32 %v460, %v649
        %651 = vmatprep.mubr.f32.mxu0 0.0
        %652 = vmatmul.mubr.f32.gmra.mrb[0].mxu0 %v478
        %v653 = vpop.f32.mrb[0].mxu0
        %v654 = vadd.f32 %v465, %v653
        %v655 = vpop.f32.mrb[0].mxu0
        %v656 = vadd.f32 %v465, %v655
        %657 = vdwg.mxu0
        %v658 = vmax.f32 %v547, 0.0
        %v659 = vmax.f32 %v549, 0.0
        %v660 = vmax.f32 %v636, 0.0
        %v661 = vmax.f32 %v638, 0.0
        %v662 = vmax.f32 %v553, 0.0
        %v663 = vmax.f32 %v555, 0.0
        %v664 = vmax.f32 %v642, 0.0
        %v665 = vmax.f32 %v644, 0.0
        %v666 = vmax.f32 %v559, 0.0
        %v667 = vmax.f32 %v561, 0.0
        %v668 = vmax.f32 %v648, 0.0
        %v669 = vmax.f32 %v650, 0.0
        %v670 = vmax.f32 %v565, 0.0
        %v671 = vmax.f32 %v567, 0.0
        %v672 = vmax.f32 %v654, 0.0
        %v673 = vmax.f32 %v656, 0.0
        %s674 = scalar_lea.vmem %s2, 32
        %v675 = vld [vmem:[%s674] sm:$0xff]
        %v676 = vld [vmem:[%s674 + $0x8] sm:$0xff]
        %v677 = vld [vmem:[%s674 + $0x10] sm:$0xff]
        %v678 = vld [vmem:[%s674 + $0x18] sm:$0xff]
        %s679 = scalar_lea.vmem %s3, 64
        %v680 = vld [vmem:[%s679] sm:$0xff]
        %v681 = vld [vmem:[%s679 + $0x8] sm:$0xff]
        %v682 = vld [vmem:[%s679 + $0x10] sm:$0xff]
        %v683 = vld [vmem:[%s679 + $0x18] sm:$0xff]
        %685 = vset.pattern.permute.xlu0 0
        %686 = vperm.xlu0 %685, %v680
        %v687 = vpop.permute.xlu0 %686
        %690 = vset.pattern.permute.xlu0 0
        %691 = vperm.xlu0 %690, %v681
        %v692 = vpop.permute.xlu0 %691
        %695 = vset.pattern.permute.xlu0 0
        %696 = vperm.xlu0 %695, %v682
        %v697 = vpop.permute.xlu0 %696
        %700 = vset.pattern.permute.xlu0 0
        %701 = vperm.xlu0 %700, %v683
        %v702 = vpop.permute.xlu0 %701
        %v705 = vsel %vm467, %v675, 0
        %v708 = vsel %vm467, %v676, 0
        %v711 = vsel %vm467, %v677, 0
        %v714 = vsel %vm467, %v678, 0
        %716 = vmatprep.subr.mxu0 %v659
        %717 = vmatpush1.msra.mxu0 %v658
        %718 = vmatprep.subr.mxu0 %v663
        %719 = vmatpush1.msra.mxu0 %v662
        %720 = vmatprep.subr.mxu0 %v667
        %721 = vmatpush1.msra.mxu0 %v666
        %722 = vmatprep.subr.mxu0 %v671
        %723 = vmatpush1.msra.mxu0 %v670
        %724 = vmatprep.subr.mxu0 0.0
        %725 = vmatpush1.msra.mxu0 0.0
        %726 = vmatprep.subr.mxu0 0.0
        %727 = vmatpush1.msra.mxu0 0.0
        %728 = vmatprep.subr.mxu0 0.0
        %729 = vmatpush1.msra.mxu0 0.0
        %730 = vmatprep.subr.mxu0 0.0
        %731 = vmatpush1.msra.mxu0 0.0
        %732 = vmatprep.subr.mxu0 0.0
        %733 = vmatpush1.msra.mxu0 0.0
        %734 = vmatprep.subr.mxu0 0.0
        %735 = vmatpush1.msra.mxu0 0.0
        %736 = vmatprep.subr.mxu0 0.0
        %737 = vmatpush1.msra.mxu0 0.0
        %738 = vmatprep.subr.mxu0 0.0
        %739 = vmatpush1.msra.mxu0 0.0
        %740 = vmatprep.subr.mxu0 0.0
        %741 = vmatpush1.msra.mxu0 0.0
        %742 = vmatprep.subr.mxu0 0.0
        %743 = vmatpush1.msra.mxu0 0.0
        %744 = vmatprep.subr.mxu0 0.0
        %745 = vmatpush1.msra.mxu0 0.0
        %746 = vmatprep.subr.mxu0 0.0
        %747 = vmatpush1.msra.mxu0 0.0
        %748 = vmatprep.subr.mxu0 0.0
        %749 = vmatpush1.msra.mxu0 0.0
        %750 = vmatprep.subr.mxu0 0.0
        %751 = vmatpush1.msra.mxu0 0.0
        %752 = vmatprep.subr.mxu0 0.0
        %753 = vmatpush1.msra.mxu0 0.0
        %754 = vmatprep.subr.mxu0 0.0
        %755 = vmatpush1.msra.mxu0 0.0
        %756 = vmatprep.subr.mxu0 0.0
        %757 = vmatpush1.msra.mxu0 0.0
        %758 = vmatprep.subr.mxu0 0.0
        %759 = vmatpush1.msra.mxu0 0.0
        %760 = vmatprep.subr.mxu0 0.0
        %761 = vmatpush1.msra.mxu0 0.0
        %762 = vmatprep.subr.mxu0 0.0
        %763 = vmatpush1.msra.mxu0 0.0
        %764 = vmatprep.subr.mxu0 0.0
        %765 = vmatpush1.msra.mxu0 0.0
        %766 = vmatprep.subr.mxu0 0.0
        %767 = vmatpush1.msra.mxu0 0.0
        %768 = vmatprep.subr.mxu0 0.0
        %769 = vmatpush1.msra.mxu0 0.0
        %770 = vmatprep.subr.mxu0 0.0
        %771 = vmatpush1.msra.mxu0 0.0
        %772 = vmatprep.subr.mxu0 0.0
        %773 = vmatpush1.msra.mxu0 0.0
        %774 = vmatprep.subr.mxu0 0.0
        %775 = vmatpush1.msra.mxu0 0.0
        %776 = vmatprep.subr.mxu0 0.0
        %777 = vmatpush1.msra.mxu0 0.0
        %778 = vmatprep.subr.mxu0 0.0
        %779 = vmatpush1.msra.mxu0 0.0
        %780 = vmatprep.mubr.f32.mxu0 0.0
        %781 = vmatmul.mubr.f32.gmra.mrb[0].mxu0 %v705
        %v782 = vpop.f32.mrb[0].mxu0
        %v783 = vadd.f32 %v687, %v782
        %v784 = vpop.f32.mrb[0].mxu0
        %v785 = vadd.f32 %v687, %v784
        %786 = vmatprep.mubr.f32.mxu0 0.0
        %787 = vmatmul.mubr.f32.gmra.mrb[0].mxu0 %v708
        %v788 = vpop.f32.mrb[0].mxu0
        %v789 = vadd.f32 %v692, %v788
        %v790 = vpop.f32.mrb[0].mxu0
        %v791 = vadd.f32 %v692, %v790
        %792 = vmatprep.mubr.f32.mxu0 0.0
        %793 = vmatmul.mubr.f32.gmra.mrb[0].mxu0 %v711
        %v794 = vpop.f32.mrb[0].mxu0
        %v795 = vadd.f32 %v697, %v794
        %v796 = vpop.f32.mrb[0].mxu0
        %v797 = vadd.f32 %v697, %v796
        %798 = vmatprep.mubr.f32.mxu0 0.0
        %799 = vmatmul.mubr.f32.gmra.mrb[0].mxu0 %v714
        %v800 = vpop.f32.mrb[0].mxu0
        %v801 = vadd.f32 %v702, %v800
        %v802 = vpop.f32.mrb[0].mxu0
        %v803 = vadd.f32 %v702, %v802
        %804 = vdwg.mxu0
        %805 = vmatprep.subr.mxu0 %v661
        %806 = vmatpush1.msra.mxu0 %v660
        %807 = vmatprep.subr.mxu0 %v665
        %808 = vmatpush1.msra.mxu0 %v664
        %809 = vmatprep.subr.mxu0 %v669
        %810 = vmatpush1.msra.mxu0 %v668
        %811 = vmatprep.subr.mxu0 %v673
        %812 = vmatpush1.msra.mxu0 %v672
        %813 = vmatprep.subr.mxu0 0.0
        %814 = vmatpush1.msra.mxu0 0.0
        %815 = vmatprep.subr.mxu0 0.0
        %816 = vmatpush1.msra.mxu0 0.0
        %817 = vmatprep.subr.mxu0 0.0
        %818 = vmatpush1.msra.mxu0 0.0
        %819 = vmatprep.subr.mxu0 0.0
        %820 = vmatpush1.msra.mxu0 0.0
        %821 = vmatprep.subr.mxu0 0.0
        %822 = vmatpush1.msra.mxu0 0.0
        %823 = vmatprep.subr.mxu0 0.0
        %824 = vmatpush1.msra.mxu0 0.0
        %825 = vmatprep.subr.mxu0 0.0
        %826 = vmatpush1.msra.mxu0 0.0
        %827 = vmatprep.subr.mxu0 0.0
        %828 = vmatpush1.msra.mxu0 0.0
        %829 = vmatprep.subr.mxu0 0.0
        %830 = vmatpush1.msra.mxu0 0.0
        %831 = vmatprep.subr.mxu0 0.0
        %832 = vmatpush1.msra.mxu0 0.0
        %833 = vmatprep.subr.mxu0 0.0
        %834 = vmatpush1.msra.mxu0 0.0
        %835 = vmatprep.subr.mxu0 0.0
        %836 = vmatpush1.msra.mxu0 0.0
        %837 = vmatprep.subr.mxu0 0.0
        %838 = vmatpush1.msra.mxu0 0.0
        %839 = vmatprep.subr.mxu0 0.0
        %840 = vmatpush1.msra.mxu0 0.0
        %841 = vmatprep.subr.mxu0 0.0
        %842 = vmatpush1.msra.mxu0 0.0
        %843 = vmatprep.subr.mxu0 0.0
        %844 = vmatpush1.msra.mxu0 0.0
        %845 = vmatprep.subr.mxu0 0.0
        %846 = vmatpush1.msra.mxu0 0.0
        %847 = vmatprep.subr.mxu0 0.0
        %848 = vmatpush1.msra.mxu0 0.0
        %849 = vmatprep.subr.mxu0 0.0
        %850 = vmatpush1.msra.mxu0 0.0
        %851 = vmatprep.subr.mxu0 0.0
        %852 = vmatpush1.msra.mxu0 0.0
        %853 = vmatprep.subr.mxu0 0.0
        %854 = vmatpush1.msra.mxu0 0.0
        %855 = vmatprep.subr.mxu0 0.0
        %856 = vmatpush1.msra.mxu0 0.0
        %857 = vmatprep.subr.mxu0 0.0
        %858 = vmatpush1.msra.mxu0 0.0
        %859 = vmatprep.subr.mxu0 0.0
        %860 = vmatpush1.msra.mxu0 0.0
        %861 = vmatprep.subr.mxu0 0.0
        %862 = vmatpush1.msra.mxu0 0.0
        %863 = vmatprep.subr.mxu0 0.0
        %864 = vmatpush1.msra.mxu0 0.0
        %865 = vmatprep.subr.mxu0 0.0
        %866 = vmatpush1.msra.mxu0 0.0
        %867 = vmatprep.subr.mxu0 0.0
        %868 = vmatpush1.msra.mxu0 0.0
        %869 = vmatprep.mubr.f32.mxu0 0.0
        %870 = vmatmul.mubr.f32.gmra.mrb[0].mxu0 %v705
        %v871 = vpop.f32.mrb[0].mxu0
        %v872 = vadd.f32 %v687, %v871
        %v873 = vpop.f32.mrb[0].mxu0
        %v874 = vadd.f32 %v687, %v873
        %875 = vmatprep.mubr.f32.mxu0 0.0
        %876 = vmatmul.mubr.f32.gmra.mrb[0].mxu0 %v708
        %v877 = vpop.f32.mrb[0].mxu0
        %v878 = vadd.f32 %v692, %v877
        %v879 = vpop.f32.mrb[0].mxu0
        %v880 = vadd.f32 %v692, %v879
        %881 = vmatprep.mubr.f32.mxu0 0.0
        %882 = vmatmul.mubr.f32.gmra.mrb[0].mxu0 %v711
        %v883 = vpop.f32.mrb[0].mxu0
        %v884 = vadd.f32 %v697, %v883
        %v885 = vpop.f32.mrb[0].mxu0
        %v886 = vadd.f32 %v697, %v885
        %887 = vmatprep.mubr.f32.mxu0 0.0
        %888 = vmatmul.mubr.f32.gmra.mrb[0].mxu0 %v714
        %v889 = vpop.f32.mrb[0].mxu0
        %v890 = vadd.f32 %v702, %v889
        %v891 = vpop.f32.mrb[0].mxu0
        %v892 = vadd.f32 %v702, %v891
        %893 = vdwg.mxu0
        %v894 = vmax.f32 %v783, 0.0
        %v895 = vmax.f32 %v785, 0.0
        %v896 = vmax.f32 %v872, 0.0
        %v897 = vmax.f32 %v874, 0.0
        %v898 = vmax.f32 %v789, 0.0
        %v899 = vmax.f32 %v791, 0.0
        %v900 = vmax.f32 %v878, 0.0
        %v901 = vmax.f32 %v880, 0.0
        %v902 = vmax.f32 %v795, 0.0
        %v903 = vmax.f32 %v797, 0.0
        %v904 = vmax.f32 %v884, 0.0
        %v905 = vmax.f32 %v886, 0.0
        %v906 = vmax.f32 %v801, 0.0
        %v907 = vmax.f32 %v803, 0.0
        %v908 = vmax.f32 %v890, 0.0
        %v909 = vmax.f32 %v892, 0.0
        %s910 = scalar_lea.vmem %s2, 64
        %v911 = vld [vmem:[%s910] sm:$0xff]
        %v912 = vld [vmem:[%s910 + $0x8] sm:$0xff]
        %v913 = vld [vmem:[%s910 + $0x10] sm:$0xff]
        %v914 = vld [vmem:[%s910 + $0x18] sm:$0xff]
        %s915 = scalar_lea.vmem %s3, 96
        %v916 = vld [vmem:[%s915] sm:$0xff]
        %v917 = vld [vmem:[%s915 + $0x8] sm:$0xff]
        %v918 = vld [vmem:[%s915 + $0x10] sm:$0xff]
        %v919 = vld [vmem:[%s915 + $0x18] sm:$0xff]
        %921 = vset.pattern.permute.xlu0 0
        %922 = vperm.xlu0 %921, %v916
        %v923 = vpop.permute.xlu0 %922
        %926 = vset.pattern.permute.xlu0 0
        %927 = vperm.xlu0 %926, %v917
        %v928 = vpop.permute.xlu0 %927
        %930 = vset.pattern.permute.xlu0 0
        %931 = vperm.xlu0 %930, %v918
        %v932 = vpop.permute.xlu0 %931
        %934 = vset.pattern.permute.xlu0 0
        %935 = vperm.xlu0 %934, %v919
        %v936 = vpop.permute.xlu0 %935
        %v938 = vsel %vm467, %v911, 0
        %v941 = vsel %vm467, %v912, 0
        %v944 = vsel %vm467, %v913, 0
        %v947 = vsel %vm467, %v914, 0
        %949 = vmatprep.subr.mxu0 %v895
        %950 = vmatpush1.msra.mxu0 %v894
        %951 = vmatprep.subr.mxu0 %v899
        %952 = vmatpush1.msra.mxu0 %v898
        %953 = vmatprep.subr.mxu0 %v903
        %954 = vmatpush1.msra.mxu0 %v902
        %955 = vmatprep.subr.mxu0 %v907
        %956 = vmatpush1.msra.mxu0 %v906
        %957 = vmatprep.subr.mxu0 0.0
        %958 = vmatpush1.msra.mxu0 0.0
        %959 = vmatprep.subr.mxu0 0.0
        %960 = vmatpush1.msra.mxu0 0.0
        %961 = vmatprep.subr.mxu0 0.0
        %962 = vmatpush1.msra.mxu0 0.0
        %963 = vmatprep.subr.mxu0 0.0
        %964 = vmatpush1.msra.mxu0 0.0
        %965 = vmatprep.subr.mxu0 0.0
        %966 = vmatpush1.msra.mxu0 0.0
        %967 = vmatprep.subr.mxu0 0.0
        %968 = vmatpush1.msra.mxu0 0.0
        %969 = vmatprep.subr.mxu0 0.0
        %970 = vmatpush1.msra.mxu0 0.0
        %971 = vmatprep.subr.mxu0 0.0
        %972 = vmatpush1.msra.mxu0 0.0
        %973 = vmatprep.subr.mxu0 0.0
        %974 = vmatpush1.msra.mxu0 0.0
        %975 = vmatprep.subr.mxu0 0.0
        %976 = vmatpush1.msra.mxu0 0.0
        %977 = vmatprep.subr.mxu0 0.0
        %978 = vmatpush1.msra.mxu0 0.0
        %979 = vmatprep.subr.mxu0 0.0
        %980 = vmatpush1.msra.mxu0 0.0
        %981 = vmatprep.subr.mxu0 0.0
        %982 = vmatpush1.msra.mxu0 0.0
        %983 = vmatprep.subr.mxu0 0.0
        %984 = vmatpush1.msra.mxu0 0.0
        %985 = vmatprep.subr.mxu0 0.0
        %986 = vmatpush1.msra.mxu0 0.0
        %987 = vmatprep.subr.mxu0 0.0
        %988 = vmatpush1.msra.mxu0 0.0
        %989 = vmatprep.subr.mxu0 0.0
        %990 = vmatpush1.msra.mxu0 0.0
        %991 = vmatprep.subr.mxu0 0.0
        %992 = vmatpush1.msra.mxu0 0.0
        %993 = vmatprep.subr.mxu0 0.0
        %994 = vmatpush1.msra.mxu0 0.0
        %995 = vmatprep.subr.mxu0 0.0
        %996 = vmatpush1.msra.mxu0 0.0
        %997 = vmatprep.subr.mxu0 0.0
        %998 = vmatpush1.msra.mxu0 0.0
        %999 = vmatprep.subr.mxu0 0.0
        %1000 = vmatpush1.msra.mxu0 0.0
        %1001 = vmatprep.subr.mxu0 0.0
        %1002 = vmatpush1.msra.mxu0 0.0
        %1003 = vmatprep.subr.mxu0 0.0
        %1004 = vmatpush1.msra.mxu0 0.0
        %1005 = vmatprep.subr.mxu0 0.0
        %1006 = vmatpush1.msra.mxu0 0.0
        %1007 = vmatprep.subr.mxu0 0.0
        %1008 = vmatpush1.msra.mxu0 0.0
        %1009 = vmatprep.subr.mxu0 0.0
        %1010 = vmatpush1.msra.mxu0 0.0
        %1011 = vmatprep.subr.mxu0 0.0
        %1012 = vmatpush1.msra.mxu0 0.0
        %1013 = vmatprep.mubr.f32.mxu0 0.0
        %1014 = vmatmul.mubr.f32.gmra.mrb[0].mxu0 %v938
        %v1015 = vpop.f32.mrb[0].mxu0
        %v1016 = vadd.f32 %v923, %v1015
        %v1017 = vpop.f32.mrb[0].mxu0
        %v1018 = vadd.f32 %v923, %v1017
        %1019 = vmatprep.mubr.f32.mxu0 0.0
        %1020 = vmatmul.mubr.f32.gmra.mrb[0].mxu0 %v941
        %v1021 = vpop.f32.mrb[0].mxu0
        %v1022 = vpop.f32.mrb[0].mxu0
        %1023 = vmatprep.mubr.f32.mxu0 0.0
        %1024 = vmatmul.mubr.f32.gmra.mrb[0].mxu0 %v944
        %v1025 = vpop.f32.mrb[0].mxu0
        %v1026 = vpop.f32.mrb[0].mxu0
        %1027 = vmatprep.mubr.f32.mxu0 0.0
        %1028 = vmatmul.mubr.f32.gmra.mrb[0].mxu0 %v947
        %v1029 = vpop.f32.mrb[0].mxu0
        %v1030 = vpop.f32.mrb[0].mxu0
        %1031 = vdwg.mxu0
        %1032 = vmatprep.subr.mxu0 %v897
        %1033 = vmatpush1.msra.mxu0 %v896
        %1034 = vmatprep.subr.mxu0 %v901
        %1035 = vmatpush1.msra.mxu0 %v900
        %1036 = vmatprep.subr.mxu0 %v905
        %1037 = vmatpush1.msra.mxu0 %v904
        %1038 = vmatprep.subr.mxu0 %v909
        %1039 = vmatpush1.msra.mxu0 %v908
        %1040 = vmatprep.subr.mxu0 0.0
        %1041 = vmatpush1.msra.mxu0 0.0
        %1042 = vmatprep.subr.mxu0 0.0
        %1043 = vmatpush1.msra.mxu0 0.0
        %1044 = vmatprep.subr.mxu0 0.0
        %1045 = vmatpush1.msra.mxu0 0.0
        %1046 = vmatprep.subr.mxu0 0.0
        %1047 = vmatpush1.msra.mxu0 0.0
        %1048 = vmatprep.subr.mxu0 0.0
        %1049 = vmatpush1.msra.mxu0 0.0
        %1050 = vmatprep.subr.mxu0 0.0
        %1051 = vmatpush1.msra.mxu0 0.0
        %1052 = vmatprep.subr.mxu0 0.0
        %1053 = vmatpush1.msra.mxu0 0.0
        %1054 = vmatprep.subr.mxu0 0.0
        %1055 = vmatpush1.msra.mxu0 0.0
        %1056 = vmatprep.subr.mxu0 0.0
        %1057 = vmatpush1.msra.mxu0 0.0
        %1058 = vmatprep.subr.mxu0 0.0
        %1059 = vmatpush1.msra.mxu0 0.0
        %1060 = vmatprep.subr.mxu0 0.0
        %1061 = vmatpush1.msra.mxu0 0.0
        %1062 = vmatprep.subr.mxu0 0.0
        %1063 = vmatpush1.msra.mxu0 0.0
        %1064 = vmatprep.subr.mxu0 0.0
        %1065 = vmatpush1.msra.mxu0 0.0
        %1066 = vmatprep.subr.mxu0 0.0
        %1067 = vmatpush1.msra.mxu0 0.0
        %1068 = vmatprep.subr.mxu0 0.0
        %1069 = vmatpush1.msra.mxu0 0.0
        %1070 = vmatprep.subr.mxu0 0.0
        %1071 = vmatpush1.msra.mxu0 0.0
        %1072 = vmatprep.subr.mxu0 0.0
        %1073 = vmatpush1.msra.mxu0 0.0
        %1074 = vmatprep.subr.mxu0 0.0
        %1075 = vmatpush1.msra.mxu0 0.0
        %1076 = vmatprep.subr.mxu0 0.0
        %1077 = vmatpush1.msra.mxu0 0.0
        %1078 = vmatprep.subr.mxu0 0.0
        %1079 = vmatpush1.msra.mxu0 0.0
        %1080 = vmatprep.subr.mxu0 0.0
        %1081 = vmatpush1.msra.mxu0 0.0
        %1082 = vmatprep.subr.mxu0 0.0
        %1083 = vmatpush1.msra.mxu0 0.0
        %1084 = vmatprep.subr.mxu0 0.0
        %1085 = vmatpush1.msra.mxu0 0.0
        %1086 = vmatprep.subr.mxu0 0.0
        %1087 = vmatpush1.msra.mxu0 0.0
        %1088 = vmatprep.subr.mxu0 0.0
        %1089 = vmatpush1.msra.mxu0 0.0
        %1090 = vmatprep.subr.mxu0 0.0
        %1091 = vmatpush1.msra.mxu0 0.0
        %1092 = vmatprep.subr.mxu0 0.0
        %1093 = vmatpush1.msra.mxu0 0.0
        %1094 = vmatprep.subr.mxu0 0.0
        %1095 = vmatpush1.msra.mxu0 0.0
        %1096 = vmatprep.mubr.f32.mxu0 0.0
        %1097 = vmatmul.mubr.f32.gmra.mrb[0].mxu0 %v938
        %v1098 = vpop.f32.mrb[0].mxu0
        %v1099 = vadd.f32 %v923, %v1098
        %v1100 = vpop.f32.mrb[0].mxu0
        %v1101 = vadd.f32 %v923, %v1100
        %1102 = vmatprep.mubr.f32.mxu0 0.0
        %1103 = vmatmul.mubr.f32.gmra.mrb[0].mxu0 %v941
        %v1104 = vpop.f32.mrb[0].mxu0
        %v1105 = vpop.f32.mrb[0].mxu0
        %1106 = vmatprep.mubr.f32.mxu0 0.0
        %1107 = vmatmul.mubr.f32.gmra.mrb[0].mxu0 %v944
        %v1108 = vpop.f32.mrb[0].mxu0
        %v1109 = vpop.f32.mrb[0].mxu0
        %1110 = vmatprep.mubr.f32.mxu0 0.0
        %1111 = vmatmul.mubr.f32.gmra.mrb[0].mxu0 %v947
        %v1112 = vpop.f32.mrb[0].mxu0
        %v1113 = vpop.f32.mrb[0].mxu0
        %1114 = vdwg.mxu0
        %1115 = vst [vmem:[%s191] sm:$0xff] %v1016
        %1116 = vst [vmem:[%s191 + $0x8] sm:$0xff] %v1018
        %1117 = vst [vmem:[%s191 + $0x10] sm:$0xff] %v1099
        %1118 = vst [vmem:[%s191 + $0x18] sm:$0xff] %v1101
        %s1119 = sand.u32 %s115, 1
        %s1120 = scalar_lea.sflag [#allocation3], %s1119
        %s1121 = sand.u32 %s115, 1
        %s1122 = smul.addr %s1121, 32
        %s1123 = scalar_lea.vmem [#allocation2], %s1122
        // Predicated region
        $region37: #{tpu_custom_call.1} parent=35 // pred_check
          %p1124 = pneg %p125
        $region38: #{tpu_custom_call.1} parent=35 // pred_check_branch
          %1126 = sbr.rel (%p1124) target = $region40
        $region39: #{tpu_custom_call.1} parent=35 // pred_region
          %s1127 = smul.u32 4, %s18
          %s1129 = ssub.s32 512, 512
          %1130 = vsyncadd %s1120, %s1129
          %s1131 = smul.addr %s1127, 128
          %s1132 = scalar_lea.hbm %s4, %s1131
          %s1134 = sshll.u32 %s1123, 4
          %s1135 = int_to_ptr.vmem [resolvable:$true] %s1134
          %1137 = dma.vmem_to_hbm [thread:$0]  %s1135, 512, %s1132, %s1120
        $region40: #{tpu_custom_call.1} parent=35 // pred_fallthru
          _
      $region36: #{tpu_custom_call.1} parent=5 // pred_fallthru
        _
      %p1138 = scmp.le.s32.totalorder 2, %s13
      // Predicated region
      $region41: #{tpu_custom_call.1} parent=5 // pred_check
        %p1139 = pneg %p1138
      $region42: #{tpu_custom_call.1} parent=5 // pred_check_branch
        %1141 = sbr.rel (%p1139) target = $region44
      $region43: #{tpu_custom_call.1} parent=5 // pred_region
        %s1142 = ssub.s32 %s13, 2
        // Predicated region
        $region45: #{tpu_custom_call.1} parent=43 // pred_check
          %p1143 = pneg %p131
        $region46: #{tpu_custom_call.1} parent=43 // pred_check_branch
          %1145 = sbr.rel (%p1143) target = $region48
        $region47: #{tpu_custom_call.1} parent=43 // pred_region
          %s1146 = sand.u32 %s116, 1
          %s1147 = scalar_lea.sflag [#allocation3], %s1146
          %s1148 = sand.u32 %s116, 1
          %s1149 = smul.addr %s1148, 32
          %s1150 = scalar_lea.vmem [#allocation2], %s1149
          %1151 = dma.done %s1147, 512
        $region48: #{tpu_custom_call.1} parent=43 // pred_fallthru
          _
      $region44: #{tpu_custom_call.1} parent=5 // pred_fallthru
        _
    $region6: #{tpu_custom_call.1} parent=1 // loop_footer
      %s17 = sadd.s32 1, %s13
    $region7: #{tpu_custom_call.1} parent=1 // loop_footer_branch
      %12 = sbr.rel target = $region3
    $region8: #{tpu_custom_call.1} parent=1 // loop_exit
      _
    %1152 = vsyncpa [#allocation3], 1
    %s1153 = scalar_lea.sflag [#allocation3], 1
    %1154 = vsyncpa %s1153, 1

</llo_original>
